<compile_context>
chip_gen: v6e
topology: v6e:2x2x1
jax: 0.10.0
libtpu: 0.0.40
codegen_flags: <defaults>
</compile_context>

<pallas_src>
import jax
import jax.numpy as jnp
from jax.experimental import pallas as pl
from jax.experimental.pallas import tpu as pltpu


def _round_up(x, m):
    return (x + m - 1) // m * m


def _cdiv(a, b):
    return -(-a // b)


def _dynamics_kernel(ws_ref, act_ref, w1_ref, w2_ref, whead_ref, b_ref, out_ref):
    """shared_net (Linear-ReLU-Linear-ReLU) + fused lane-packed head matmul."""
    H = w2_ref.shape[0]            # hidden size (static)
    head_n = out_ref.shape[1]      # packed head width (static)
    in_pad = w1_ref.shape[0]       # zero-padded fused layer-1 K (static)
    tm = ws_ref.shape[0]
    d_in = ws_ref.shape[1] + act_ref.shape[1]

    # Build the fused layer-1 input in registers (single K=in_pad matmul
    # instead of split-K dots).  The zero lanes line up with w1's zero rows.
    parts = [ws_ref[...], act_ref[...]]
    if in_pad > d_in:
        parts.append(jnp.zeros((tm, in_pad - d_in), jnp.float32))
    x = jnp.concatenate(parts, axis=-1).astype(jnp.bfloat16)

    # Layer 1 (bf16 operands, f32 accumulation) + ReLU.
    h = jnp.dot(x, w1_ref[...], preferred_element_type=jnp.float32) + b_ref[0:1, :H]
    h = jnp.maximum(h, 0.0).astype(jnp.bfloat16)

    # Layer 2 + ReLU.
    h = jnp.dot(h, w2_ref[...], preferred_element_type=jnp.float32) + b_ref[1:2, :H]
    h = jnp.maximum(h, 0.0).astype(jnp.bfloat16)

    # Both heads in one matmul; narrow (tile_m, head_n) f32 output slab.
    out_ref[...] = (jnp.dot(h, whead_ref[...], preferred_element_type=jnp.float32)
                    + b_ref[2:3, :head_n])


def prepare_params(raw, world_enc_dim):
    """One-time parameter prep: pad+cast w1, fuse+pack heads, pack biases."""
    w1, b1 = raw["w1"], raw["b1"]            # (enc+act, H), (1, H)
    w2, b2 = raw["w2"], raw["b2"]            # (H, H),      (1, H)
    w_ns, b_ns = raw["w_ns"], raw["b_ns"]    # (H, S),      (1, S)
    w_r, b_r = raw["w_r"], raw["b_r"]        # (H, 1),      (1, 1)

    d_in, H = w1.shape
    S = w_ns.shape[1]
    head_n = _round_up(S + 1, 32)            # narrow packed head width
    in_pad = _round_up(d_in, 128)            # fused layer-1 K (zero rows appended)

    w1_p = jnp.zeros((in_pad, H), jnp.float32).at[:d_in].set(w1)
    w_head = (jnp.zeros((H, head_n), jnp.float32)
              .at[:, :S].set(w_ns)
              .at[:, S:S + 1].set(w_r))

    bw = max(H, head_n)
    biases = (jnp.zeros((3, bw), jnp.float32)
              .at[0, :H].set(b1[0])
              .at[1, :H].set(b2[0])
              .at[2, :S].set(b_ns[0])
              .at[2, S:S + 1].set(b_r[0]))

    return dict(
        w1=w1_p.astype(jnp.bfloat16),        # (in_pad, H) bf16
        w2=w2.astype(jnp.bfloat16),          # (H, H)      bf16
        w_head=w_head.astype(jnp.bfloat16),  # (H, head_n) bf16
        biases=biases,                       # (3, bw)     f32 (post-accumulate add)
        world_enc_dim=world_enc_dim,
        next_state_dim=S,
    )


def _pick_tile_m(batch):
    """Batch tile: big tiles amortize per-step overhead; keep >=2 (even) grid
    steps for large batches so v7x's two TensorCores both get work; round to 8
    rows so the ragged tail (Pallas OOB masking) wastes <8 rows per step."""
    if batch <= 512:
        n_steps = 1
    else:
        n_steps = max(2, _cdiv(batch, 1024))
        if n_steps % 2:
            n_steps += 1
    return _round_up(_cdiv(batch, n_steps), 8)


def world_dynamics_forward(world_state, actions, prep):
    """Run the fused dynamics MLP. Returns (next_state_pred, reward_pred)."""
    B, d_ws = world_state.shape
    d_act = actions.shape[1]
    in_pad, H = prep["w1"].shape
    head_n = prep["w_head"].shape[1]
    S = prep["next_state_dim"]

    tile_m = _pick_tile_m(B)
    grid = (_cdiv(B, tile_m),)

    out = pl.pallas_call(
        _dynamics_kernel,
        out_shape=jax.ShapeDtypeStruct((B, head_n), jnp.float32),
        grid=grid,
        in_specs=[
            pl.BlockSpec((tile_m, d_ws), lambda i: (i, 0)),
            pl.BlockSpec((tile_m, d_act), lambda i: (i, 0)),
            # Constant (0, 0) index maps: weights/biases are DMA'd once and
            # stay VMEM-resident across the batch grid steps.
            pl.BlockSpec((in_pad, H), lambda i: (0, 0)),
            pl.BlockSpec((H, H), lambda i: (0, 0)),
            pl.BlockSpec((H, head_n), lambda i: (0, 0)),
            pl.BlockSpec(prep["biases"].shape, lambda i: (0, 0)),
        ],
        out_specs=pl.BlockSpec((tile_m, head_n), lambda i: (i, 0)),
        compiler_params=pltpu.CompilerParams(
            dimension_semantics=("parallel",)),
    )(world_state, actions, prep["w1"], prep["w2"], prep["w_head"],
      prep["biases"])

    return out[:, :S], out[:, S:S + 1]


def init_params(key, world_enc_dim, action_dim, hidden_size, next_state_dim):
    """Deterministic synthetic parameter init (PyTorch-Linear-like uniform)."""
    def linear(k, fan_in, fan_out):
        k_w, k_b = jax.random.split(k)
        bound = 1.0 / jnp.sqrt(fan_in)
        w = jax.random.uniform(k_w, (fan_in, fan_out), jnp.float32, -bound, bound)
        b = jax.random.uniform(k_b, (1, fan_out), jnp.float32, -bound, bound)
        return w, b

    in_dim = world_enc_dim + action_dim
    k1, k2, k3, k4 = jax.random.split(key, 4)
    w1, b1 = linear(k1, in_dim, hidden_size)
    w2, b2 = linear(k2, hidden_size, hidden_size)
    w_ns, b_ns = linear(k3, hidden_size, next_state_dim)
    w_r, b_r = linear(k4, hidden_size, 1)
    return dict(w1=w1, b1=b1, w2=w2, b2=b2,
                w_ns=w_ns, b_ns=b_ns, w_r=w_r, b_r=b_r)


if __name__ == "__main__":
    # Module defaults: world_enc_dim=64, hidden=128;
    # action_dim=16, scalar_dims=[4,4,4], global_dim=8 -> next_state_dim=20.
    world_enc_dim = 64
    action_dim = 16
    hidden_size = 128
    scalar_dims = [4, 4, 4]
    global_dim = 8
    next_state_dim = sum(scalar_dims) + global_dim
    batch = 8

    key = jax.random.PRNGKey(0)
    k_params, k_ws, k_act = jax.random.split(key, 3)
    raw = init_params(k_params, world_enc_dim, action_dim,
                      hidden_size, next_state_dim)
    prep = prepare_params(raw, world_enc_dim)   # one-time prep, reused per call

    world_state = jax.random.normal(k_ws, (batch, world_enc_dim), jnp.float32)
    actions = jax.random.normal(k_act, (batch, action_dim), jnp.float32)

    next_state_pred, reward_pred = world_dynamics_forward(
        world_state, actions, prep)
    jax.block_until_ready((next_state_pred, reward_pred))

    # Pure-JAX f32 reference (original, unfused math).
    x = jnp.concatenate([world_state, actions], axis=-1)
    h = jnp.maximum(x @ raw["w1"] + raw["b1"], 0.0)
    h = jnp.maximum(h @ raw["w2"] + raw["b2"], 0.0)
    ns_ref = h @ raw["w_ns"] + raw["b_ns"]
    r_ref = h @ raw["w_r"] + raw["b_r"]

    assert next_state_pred.shape == (batch, next_state_dim)
    assert reward_pred.shape == (batch, 1)
    # Kernel runs the matmuls in bf16 (f32 accumulation) -> looser tolerance.
    assert jnp.allclose(next_state_pred, ns_ref, atol=3e-2, rtol=3e-2)
    assert jnp.allclose(reward_pred, r_ref, atol=3e-2, rtol=3e-2)

    print("KERNEL_OK")
</pallas_src>

<mosaic_0001>
module attributes {stable_mosaic.version = 11 : i64} {
  func.func @_dynamics_kernel(%arg0: i32, %arg1: memref<8x64xf32, #tpu.memory_space<vmem>>, %arg2: memref<8x16xf32, #tpu.memory_space<vmem>>, %arg3: memref<128x128xbf16, #tpu.memory_space<vmem>>, %arg4: memref<128x128xbf16, #tpu.memory_space<vmem>>, %arg5: memref<128x32xbf16, #tpu.memory_space<vmem>>, %arg6: memref<3x128xf32, #tpu.memory_space<vmem>>, %arg7: memref<8x32xf32, #tpu.memory_space<vmem>>) attributes {dimension_semantics = [#tpu.dimension_semantics<parallel>], iteration_bounds = array<i64: 1>, scalar_prefetch = 0 : i64, scratch_operands = 0 : i64, tpu.core_type = #tpu.core_type<tc>, window_params = [{transform_indices = @transform_0, window_bounds = array<i64: 8, 64>}, {transform_indices = @transform_1, window_bounds = array<i64: 8, 16>}, {pipeline_mode = #tpu.pipeline_mode<synchronous>, transform_indices = @transform_2, window_bounds = array<i64: 128, 128>}, {pipeline_mode = #tpu.pipeline_mode<synchronous>, transform_indices = @transform_3, window_bounds = array<i64: 128, 128>}, {pipeline_mode = #tpu.pipeline_mode<synchronous>, transform_indices = @transform_4, window_bounds = array<i64: 128, 32>}, {pipeline_mode = #tpu.pipeline_mode<synchronous>, transform_indices = @transform_5, window_bounds = array<i64: 3, 128>}, {transform_indices = @transform_6, window_bounds = array<i64: 8, 32>}]} {
    %c0 = arith.constant 0 : index
    %c0_0 = arith.constant 0 : index
    %0 = vector.load %arg1[%c0, %c0_0] : memref<8x64xf32, #tpu.memory_space<vmem>>, vector<8x64xf32>
    %c0_1 = arith.constant 0 : index
    %c0_2 = arith.constant 0 : index
    %1 = vector.load %arg2[%c0_1, %c0_2] : memref<8x16xf32, #tpu.memory_space<vmem>>, vector<8x16xf32>
    %cst = arith.constant 0.000000e+00 : f32
    %2 = vector.broadcast %cst : f32 to vector<8x48xf32>
    %3 = tpu.concatenate %0, %1, %2 in 1 : vector<8x64xf32>, vector<8x16xf32>, vector<8x48xf32> -> vector<8x128xf32>
    %4 = arith.truncf %3 : vector<8x128xf32> to vector<8x128xbf16>
    %c0_3 = arith.constant 0 : index
    %c0_4 = arith.constant 0 : index
    %5 = vector.load %arg3[%c0_3, %c0_4] : memref<128x128xbf16, #tpu.memory_space<vmem>>, vector<128x128xbf16>
    %cst_5 = arith.constant dense<0.000000e+00> : vector<8x128xf32>
    %6 = tpu.matmul %4, %5, %cst_5 {dimension_numbers = #tpu.dot_dimension_numbers<[1], [0], [0], [1], [0, 0, 1, 1], [], []>} : vector<8x128xbf16>, vector<128x128xbf16>, vector<8x128xf32> -> vector<8x128xf32>
    %c0_6 = arith.constant 0 : index
    %c0_7 = arith.constant 0 : index
    %7 = vector.load %arg6[%c0_6, %c0_7] : memref<3x128xf32, #tpu.memory_space<vmem>>, vector<1x128xf32>
    %8 = vector.broadcast %7 : vector<1x128xf32> to vector<8x128xf32>
    %9 = arith.addf %6, %8 : vector<8x128xf32>
    %cst_8 = arith.constant 0.000000e+00 : f32
    %10 = vector.broadcast %cst_8 : f32 to vector<8x128xf32>
    %11 = arith.maximumf %9, %10 : vector<8x128xf32>
    %12 = arith.truncf %11 : vector<8x128xf32> to vector<8x128xbf16>
    %c0_9 = arith.constant 0 : index
    %c0_10 = arith.constant 0 : index
    %13 = vector.load %arg4[%c0_9, %c0_10] : memref<128x128xbf16, #tpu.memory_space<vmem>>, vector<128x128xbf16>
    %cst_11 = arith.constant dense<0.000000e+00> : vector<8x128xf32>
    %14 = tpu.matmul %12, %13, %cst_11 {dimension_numbers = #tpu.dot_dimension_numbers<[1], [0], [0], [1], [0, 0, 1, 1], [], []>} : vector<8x128xbf16>, vector<128x128xbf16>, vector<8x128xf32> -> vector<8x128xf32>
    %c1 = arith.constant 1 : index
    %c0_12 = arith.constant 0 : index
    %15 = vector.load %arg6[%c1, %c0_12] : memref<3x128xf32, #tpu.memory_space<vmem>>, vector<1x128xf32>
    %16 = vector.broadcast %15 : vector<1x128xf32> to vector<8x128xf32>
    %17 = arith.addf %14, %16 : vector<8x128xf32>
    %cst_13 = arith.constant 0.000000e+00 : f32
    %18 = vector.broadcast %cst_13 : f32 to vector<8x128xf32>
    %19 = arith.maximumf %17, %18 : vector<8x128xf32>
    %20 = arith.truncf %19 : vector<8x128xf32> to vector<8x128xbf16>
    %c0_14 = arith.constant 0 : index
    %c0_15 = arith.constant 0 : index
    %21 = vector.load %arg5[%c0_14, %c0_15] : memref<128x32xbf16, #tpu.memory_space<vmem>>, vector<128x32xbf16>
    %cst_16 = arith.constant dense<0.000000e+00> : vector<8x32xf32>
    %22 = tpu.matmul %20, %21, %cst_16 {dimension_numbers = #tpu.dot_dimension_numbers<[1], [0], [0], [1], [0, 0, 1, 1], [], []>} : vector<8x128xbf16>, vector<128x32xbf16>, vector<8x32xf32> -> vector<8x32xf32>
    %c2 = arith.constant 2 : index
    %c0_17 = arith.constant 0 : index
    %23 = vector.load %arg6[%c2, %c0_17] : memref<3x128xf32, #tpu.memory_space<vmem>>, vector<1x32xf32>
    %24 = vector.broadcast %23 : vector<1x32xf32> to vector<8x32xf32>
    %25 = arith.addf %22, %24 : vector<8x32xf32>
    %c0_18 = arith.constant 0 : index
    %c0_19 = arith.constant 0 : index
    %26 = vector.load %arg7[%c0_18, %c0_19] : memref<8x32xf32, #tpu.memory_space<vmem>>, vector<8x32xf32>
    tpu.vector_store %arg7[%c0_18, %c0_19], %25 {strides = array<i32>} : memref<8x32xf32, #tpu.memory_space<vmem>>, vector<8x32xf32>,
    return
  }
  func.func @transform_0(%arg0: i32) -> (i32, i32) {
    %c0_i32 = arith.constant 0 : i32
    %c0_i32_0 = arith.constant 0 : i32
    return %arg0, %c0_i32 : i32, i32
  }
  func.func @transform_1(%arg0: i32) -> (i32, i32) {
    %c0_i32 = arith.constant 0 : i32
    %c0_i32_0 = arith.constant 0 : i32
    return %arg0, %c0_i32 : i32, i32
  }
  func.func @transform_2(%arg0: i32) -> (i32, i32) {
    %c0_i32 = arith.constant 0 : i32
    %c0_i32_0 = arith.constant 0 : i32
    %c0_i32_1 = arith.constant 0 : i32
    return %c0_i32, %c0_i32_0 : i32, i32
  }
  func.func @transform_3(%arg0: i32) -> (i32, i32) {
    %c0_i32 = arith.constant 0 : i32
    %c0_i32_0 = arith.constant 0 : i32
    %c0_i32_1 = arith.constant 0 : i32
    return %c0_i32, %c0_i32_0 : i32, i32
  }
  func.func @transform_4(%arg0: i32) -> (i32, i32) {
    %c0_i32 = arith.constant 0 : i32
    %c0_i32_0 = arith.constant 0 : i32
    %c0_i32_1 = arith.constant 0 : i32
    return %c0_i32, %c0_i32_0 : i32, i32
  }
  func.func @transform_5(%arg0: i32) -> (i32, i32) {
    %c0_i32 = arith.constant 0 : i32
    %c0_i32_0 = arith.constant 0 : i32
    %c0_i32_1 = arith.constant 0 : i32
    return %c0_i32, %c0_i32_0 : i32, i32
  }
  func.func @transform_6(%arg0: i32) -> (i32, i32) {
    %c0_i32 = arith.constant 0 : i32
    %c0_i32_0 = arith.constant 0 : i32
    return %arg0, %c0_i32 : i32, i32
  }
}

</mosaic_0001>

<llo_original>
// kernel: tpu_custom_call.1
$region0: #{tpu_custom_call.1}
  #allocation0 [shape = 'u32[]', space=smem, size = 0x4, offset = 0x4, fixed_abs, tag = 'smem constant byte address 0x4 - core index']
  #allocation1 [shape = 'u32[144,128]{1,0:T(1,128)}', space=vmem, size = 0x12000, scoped, tag = 'internal scratch']
  %s0 = inlined_call_operand.vmem [shape: f32[8,64], index: 0, kind: input, shape index: {}]
  %s1 = inlined_call_operand.vmem [shape: f32[8,16], index: 1, kind: input, shape index: {}]
  %s2 = inlined_call_operand.vmem [shape: bf16[128,128], index: 2, kind: input, shape index: {}]
  %s3 = inlined_call_operand.hbm [shape: bf16[128,128], index: 3, kind: input, shape index: {}]
  %s4 = inlined_call_operand.vmem [shape: bf16[128,32], index: 4, kind: input, shape index: {}]
  %s5 = inlined_call_operand.vmem [shape: f32[3,128], index: 5, kind: input, shape index: {}]
  %s6 = inlined_call_operand.hbm [shape: f32[8,32], index: 6, kind: output, shape index: {}]
  %s7 = sld [smem:[#allocation0]]
  $region38: #{tpu_custom_call.1} parent=0
    _
  %s9 = ssub.s32 1, %s7
  %s10 = scalar_select 0, %s9, %s7
  $region1: #{tpu_custom_call.1} parent=0
    #allocation2 [shape = 'u8[32768]{0}', space=vmem, size = 0x8000, scoped, tag = 'input window, operand 3, single buffered']
    #allocation3 [shape = 's32[1]{0}', space=sflag, size = 0x4, scoped, tag = 'scoped memory for tpu_custom_call.1']
    #allocation4 [shape = 's32[1]{0}', space=sflag, size = 0x4, scoped, tag = 'scoped memory for tpu_custom_call.1']
    #allocation5 [shape = 'u8[4096]{0}', space=vmem, size = 0x1000, scoped, tag = 'output window, operand 0, single buffered']
    %11 = vsyncpa [#allocation3], 0
    %12 = vsyncpa [#allocation4], 0
    // Predicated region
    $region2: #{tpu_custom_call.1} parent=1 // pred_check
      _
    $region3: #{tpu_custom_call.1} parent=1 // pred_check_branch
      %14 = sbr.rel (0) target = $region5
    $region4: #{tpu_custom_call.1} parent=1 // pred_region
      _
    $region5: #{tpu_custom_call.1} parent=1 // pred_fallthru
      _
    // Predicated region
    $region6: #{tpu_custom_call.1} parent=1 // pred_check
      _
    $region7: #{tpu_custom_call.1} parent=1 // pred_check_branch
      %16 = sbr.rel (0) target = $region9
    $region8: #{tpu_custom_call.1} parent=1 // pred_region
      _
    $region9: #{tpu_custom_call.1} parent=1 // pred_fallthru
      _
    // Predicated region
    $region10: #{tpu_custom_call.1} parent=1 // pred_check
      _
    $region11: #{tpu_custom_call.1} parent=1 // pred_check_branch
      %18 = sbr.rel (0) target = $region13
    $region12: #{tpu_custom_call.1} parent=1 // pred_region
      _
    $region13: #{tpu_custom_call.1} parent=1 // pred_fallthru
      _
    // Predicated region
    $region14: #{tpu_custom_call.1} parent=1 // pred_check
      _
    $region15: #{tpu_custom_call.1} parent=1 // pred_check_branch
      %20 = sbr.rel (0) target = $region17
    $region16: #{tpu_custom_call.1} parent=1 // pred_region
      %s22 = ssub.s32 1024, 1024
      %23 = vsyncadd [#allocation3], %s22
      %s24 = sshll.u32 [#allocation2], 4
      %s25 = int_to_ptr.vmem [resolvable:$true] %s24
      %30 = dma.hbm_to_vmem [thread:$0]  %s3, 1024, %s25, [#allocation3], 64, 64, 4
    $region17: #{tpu_custom_call.1} parent=1 // pred_fallthru
      _
    // Predicated region
    $region18: #{tpu_custom_call.1} parent=1 // pred_check
      _
    $region19: #{tpu_custom_call.1} parent=1 // pred_check_branch
      %32 = sbr.rel (0) target = $region21
    $region20: #{tpu_custom_call.1} parent=1 // pred_region
      _
    $region21: #{tpu_custom_call.1} parent=1 // pred_fallthru
      _
    // Predicated region
    $region22: #{tpu_custom_call.1} parent=1 // pred_check
      _
    $region23: #{tpu_custom_call.1} parent=1 // pred_check_branch
      %34 = sbr.rel (0) target = $region25
    $region24: #{tpu_custom_call.1} parent=1 // pred_region
      _
    $region25: #{tpu_custom_call.1} parent=1 // pred_fallthru
      _
    // Predicated region
    $region26: #{tpu_custom_call.1} parent=1 // pred_check
      _
    $region27: #{tpu_custom_call.1} parent=1 // pred_check_branch
      %36 = sbr.rel (0) target = $region29
    $region28: #{tpu_custom_call.1} parent=1 // pred_region
      %37 = dma.done [#allocation3], 1024
    $region29: #{tpu_custom_call.1} parent=1 // pred_fallthru
      _
    %v39 = vld [vmem:[%s0] sm:$0xff]
    %v40 = vld [vmem:[%s1] sm:$0xff]
    %42 = vrot.lane.b32.xlu0 %v40, 64
    %v43 = vpop.permute.xlu0 %42
    %vm45 = vcmask 523264
    %v46 = vsel %vm45, %v39, %v43
    %vm47 = vcmask 654336
    %v48 = vsel %vm47, %v46, 0.0
    %v49 = vpack.c.bf16 %v48, %v48
    %v50 = vld [vmem:[%s2] sm:$0xf]
    %v51 = vld [vmem:[%s2 + $0x4] sm:$0xf]
    %v52 = vld [vmem:[%s2 + $0x8] sm:$0xf]
    %v53 = vld [vmem:[%s2 + $0xc] sm:$0xf]
    %v54 = vld [vmem:[%s2 + $0x10] sm:$0xf]
    %v55 = vld [vmem:[%s2 + $0x14] sm:$0xf]
    %v56 = vld [vmem:[%s2 + $0x18] sm:$0xf]
    %v57 = vld [vmem:[%s2 + $0x1c] sm:$0xf]
    %v58 = vld [vmem:[%s2 + $0x20] sm:$0xf]
    %v59 = vld [vmem:[%s2 + $0x24] sm:$0xf]
    %v60 = vld [vmem:[%s2 + $0x28] sm:$0xf]
    %v61 = vld [vmem:[%s2 + $0x2c] sm:$0xf]
    %v62 = vld [vmem:[%s2 + $0x30] sm:$0xf]
    %v63 = vld [vmem:[%s2 + $0x34] sm:$0xf]
    %v64 = vld [vmem:[%s2 + $0x38] sm:$0xf]
    %v65 = vld [vmem:[%s2 + $0x3c] sm:$0xf]
    %v66 = vld [vmem:[%s5] sm:$0x1]
    %v67 = vlaneseq
    %v68 = vshrl.u32 %v67, 7
    %v69 = vsub.s32 0, %v68
    %v70 = vrot.slane %v66, %v69
    %v87 = vunpack.c.l.b16 %v50
    %v88 = vunpack.c.l.b16 %v51
    %v89 = vunpack.c.l.b16 %v52
    %v90 = vunpack.c.l.b16 %v53
    %v91 = vunpack.c.l.b16 %v54
    %v92 = vunpack.c.l.b16 %v55
    %v93 = vunpack.c.l.b16 %v56
    %v94 = vunpack.c.l.b16 %v57
    %v95 = vunpack.c.l.b16 %v58
    %v96 = vunpack.c.l.b16 %v59
    %v97 = vunpack.c.l.b16 %v60
    %v98 = vunpack.c.l.b16 %v61
    %v99 = vunpack.c.l.b16 %v62
    %v100 = vunpack.c.l.b16 %v63
    %v101 = vunpack.c.l.b16 %v64
    %v102 = vunpack.c.l.b16 %v65
    %v103 = vpack.c.b16 %v88, %v87
    %v104 = vpack.c.b16 %v90, %v89
    %v105 = vpack.c.b16 %v92, %v91
    %v106 = vpack.c.b16 %v94, %v93
    %v107 = vpack.c.b16 %v96, %v95
    %v108 = vpack.c.b16 %v98, %v97
    %v109 = vpack.c.b16 %v100, %v99
    %v110 = vpack.c.b16 %v102, %v101
    %119 = vmatprep.subr.bf16.mxu0 0
    %120 = vmatpush1.bf16.msra.mxu0 %v110
    %121 = vmatprep.subr.bf16.mxu0 0
    %122 = vmatpush1.bf16.msra.mxu0 %v109
    %123 = vmatprep.subr.bf16.mxu0 0
    %124 = vmatpush1.bf16.msra.mxu0 %v108
    %125 = vmatprep.subr.bf16.mxu0 0
    %126 = vmatpush1.bf16.msra.mxu0 %v107
    %127 = vmatprep.subr.bf16.mxu0 0
    %128 = vmatpush1.bf16.msra.mxu0 %v106
    %129 = vmatprep.subr.bf16.mxu0 0
    %130 = vmatpush1.bf16.msra.mxu0 %v105
    %131 = vmatprep.subr.bf16.mxu0 0
    %132 = vmatpush1.bf16.msra.mxu0 %v104
    %133 = vmatprep.subr.bf16.mxu0 0
    %134 = vmatpush1.bf16.msra.mxu0 %v103
    %135 = vmatprep.subr.bf16.mxu0 0
    %136 = vmatpush2.bf16.msra.mxu0 0
    %137 = vmatprep.subr.bf16.mxu0 0
    %138 = vmatpush2.bf16.msra.mxu0 0
    %139 = vmatprep.subr.bf16.mxu0 0
    %140 = vmatpush2.bf16.msra.mxu0 0
    %141 = vmatprep.subr.bf16.mxu0 0
    %142 = vmatpush2.bf16.msra.mxu0 0
    %143 = vmatprep.subr.bf16.mxu0 0
    %144 = vmatpush2.bf16.msra.mxu0 0
    %145 = vmatprep.subr.bf16.mxu0 0
    %146 = vmatpush2.bf16.msra.mxu0 0
    %147 = vmatprep.subr.bf16.mxu0 0
    %148 = vmatpush2.bf16.msra.mxu0 0
    %149 = vmatprep.subr.bf16.mxu0 0
    %150 = vmatpush2.bf16.msra.mxu0 0
    %151 = vmatprep.mubr.bf16.mxu0 0
    %152 = vmatmul.mubr.bf16.gmra.mxu0 %v49
    %v153 = vpop.f32.mrf.mxu0
    %v154 = vadd.f32 %v70, %v153
    %v155 = vpop.f32.mrf.mxu0
    %v156 = vpop.f32.mrf.mxu0
    %v157 = vpop.f32.mrf.mxu0
    %158 = vdwg.mxu0
    %v159 = vmax.f32 %v154, 0.0
    %v160 = vpack.c.bf16 %v159, %v159
    %v161 = vld [vmem:[#allocation2] sm:$0xf]
    %v162 = vld [vmem:[#allocation2 + $0x4] sm:$0xf]
    %v163 = vld [vmem:[#allocation2 + $0x8] sm:$0xf]
    %v164 = vld [vmem:[#allocation2 + $0xc] sm:$0xf]
    %v165 = vld [vmem:[#allocation2 + $0x10] sm:$0xf]
    %v166 = vld [vmem:[#allocation2 + $0x14] sm:$0xf]
    %v167 = vld [vmem:[#allocation2 + $0x18] sm:$0xf]
    %v168 = vld [vmem:[#allocation2 + $0x1c] sm:$0xf]
    %v169 = vld [vmem:[#allocation2 + $0x20] sm:$0xf]
    %v170 = vld [vmem:[#allocation2 + $0x24] sm:$0xf]
    %v171 = vld [vmem:[#allocation2 + $0x28] sm:$0xf]
    %v172 = vld [vmem:[#allocation2 + $0x2c] sm:$0xf]
    %v173 = vld [vmem:[#allocation2 + $0x30] sm:$0xf]
    %v174 = vld [vmem:[#allocation2 + $0x34] sm:$0xf]
    %v175 = vld [vmem:[#allocation2 + $0x38] sm:$0xf]
    %v176 = vld [vmem:[#allocation2 + $0x3c] sm:$0xf]
    %v177 = vld [vmem:[%s5 + $0x1] sm:$0x1]
    %v178 = vlaneseq
    %v179 = vshrl.u32 %v178, 7
    %v180 = vsub.s32 0, %v179
    %v181 = vrot.slane %v177, %v180
    %v198 = vunpack.c.l.b16 %v161
    %v199 = vunpack.c.l.b16 %v162
    %v200 = vunpack.c.l.b16 %v163
    %v201 = vunpack.c.l.b16 %v164
    %v202 = vunpack.c.l.b16 %v165
    %v203 = vunpack.c.l.b16 %v166
    %v204 = vunpack.c.l.b16 %v167
    %v205 = vunpack.c.l.b16 %v168
    %v206 = vunpack.c.l.b16 %v169
    %v207 = vunpack.c.l.b16 %v170
    %v208 = vunpack.c.l.b16 %v171
    %v209 = vunpack.c.l.b16 %v172
    %v210 = vunpack.c.l.b16 %v173
    %v211 = vunpack.c.l.b16 %v174
    %v212 = vunpack.c.l.b16 %v175
    %v213 = vunpack.c.l.b16 %v176
    %v214 = vpack.c.b16 %v199, %v198
    %v215 = vpack.c.b16 %v201, %v200
    %v216 = vpack.c.b16 %v203, %v202
    %v217 = vpack.c.b16 %v205, %v204
    %v218 = vpack.c.b16 %v207, %v206
    %v219 = vpack.c.b16 %v209, %v208
    %v220 = vpack.c.b16 %v211, %v210
    %v221 = vpack.c.b16 %v213, %v212
    %230 = vmatprep.subr.bf16.mxu0 0
    %231 = vmatpush1.bf16.msra.mxu0 %v221
    %232 = vmatprep.subr.bf16.mxu0 0
    %233 = vmatpush1.bf16.msra.mxu0 %v220
    %234 = vmatprep.subr.bf16.mxu0 0
    %235 = vmatpush1.bf16.msra.mxu0 %v219
    %236 = vmatprep.subr.bf16.mxu0 0
    %237 = vmatpush1.bf16.msra.mxu0 %v218
    %238 = vmatprep.subr.bf16.mxu0 0
    %239 = vmatpush1.bf16.msra.mxu0 %v217
    %240 = vmatprep.subr.bf16.mxu0 0
    %241 = vmatpush1.bf16.msra.mxu0 %v216
    %242 = vmatprep.subr.bf16.mxu0 0
    %243 = vmatpush1.bf16.msra.mxu0 %v215
    %244 = vmatprep.subr.bf16.mxu0 0
    %245 = vmatpush1.bf16.msra.mxu0 %v214
    %246 = vmatprep.subr.bf16.mxu0 0
    %247 = vmatpush2.bf16.msra.mxu0 0
    %248 = vmatprep.subr.bf16.mxu0 0
    %249 = vmatpush2.bf16.msra.mxu0 0
    %250 = vmatprep.subr.bf16.mxu0 0
    %251 = vmatpush2.bf16.msra.mxu0 0
    %252 = vmatprep.subr.bf16.mxu0 0
    %253 = vmatpush2.bf16.msra.mxu0 0
    %254 = vmatprep.subr.bf16.mxu0 0
    %255 = vmatpush2.bf16.msra.mxu0 0
    %256 = vmatprep.subr.bf16.mxu0 0
    %257 = vmatpush2.bf16.msra.mxu0 0
    %258 = vmatprep.subr.bf16.mxu0 0
    %259 = vmatpush2.bf16.msra.mxu0 0
    %260 = vmatprep.subr.bf16.mxu0 0
    %261 = vmatpush2.bf16.msra.mxu0 0
    %262 = vmatprep.mubr.bf16.mxu0 0
    %263 = vmatmul.mubr.bf16.gmra.mxu0 %v160
    %v264 = vpop.f32.mrf.mxu0
    %v265 = vadd.f32 %v181, %v264
    %v266 = vpop.f32.mrf.mxu0
    %v267 = vpop.f32.mrf.mxu0
    %v268 = vpop.f32.mrf.mxu0
    %269 = vdwg.mxu0
    %v270 = vmax.f32 %v265, 0.0
    %v271 = vpack.c.bf16 %v270, %v270
    %v272 = vld [vmem:[%s4] sm:$0xf]
    %v273 = vld [vmem:[%s4 + $0x4] sm:$0xf]
    %v274 = vld [vmem:[%s4 + $0x8] sm:$0xf]
    %v275 = vld [vmem:[%s4 + $0xc] sm:$0xf]
    %v276 = vld [vmem:[%s4 + $0x10] sm:$0xf]
    %v277 = vld [vmem:[%s4 + $0x14] sm:$0xf]
    %v278 = vld [vmem:[%s4 + $0x18] sm:$0xf]
    %v279 = vld [vmem:[%s4 + $0x1c] sm:$0xf]
    %v280 = vld [vmem:[%s4 + $0x20] sm:$0xf]
    %v281 = vld [vmem:[%s4 + $0x24] sm:$0xf]
    %v282 = vld [vmem:[%s4 + $0x28] sm:$0xf]
    %v283 = vld [vmem:[%s4 + $0x2c] sm:$0xf]
    %v284 = vld [vmem:[%s4 + $0x30] sm:$0xf]
    %v285 = vld [vmem:[%s4 + $0x34] sm:$0xf]
    %v286 = vld [vmem:[%s4 + $0x38] sm:$0xf]
    %v287 = vld [vmem:[%s4 + $0x3c] sm:$0xf]
    %v288 = vld [vmem:[%s5 + $0x2] sm:$0x1]
    %v289 = vlaneseq
    %v290 = vshrl.u32 %v289, 7
    %v291 = vsub.s32 0, %v290
    %v292 = vrot.slane %v288, %v291
    %v309 = vunpack.c.l.b16 %v272
    %v310 = vunpack.c.l.b16 %v273
    %v311 = vunpack.c.l.b16 %v274
    %v312 = vunpack.c.l.b16 %v275
    %v313 = vunpack.c.l.b16 %v276
    %v314 = vunpack.c.l.b16 %v277
    %v315 = vunpack.c.l.b16 %v278
    %v316 = vunpack.c.l.b16 %v279
    %v317 = vunpack.c.l.b16 %v280
    %v318 = vunpack.c.l.b16 %v281
    %v319 = vunpack.c.l.b16 %v282
    %v320 = vunpack.c.l.b16 %v283
    %v321 = vunpack.c.l.b16 %v284
    %v322 = vunpack.c.l.b16 %v285
    %v323 = vunpack.c.l.b16 %v286
    %v324 = vunpack.c.l.b16 %v287
    %v325 = vpack.c.b16 %v310, %v309
    %v326 = vpack.c.b16 %v312, %v311
    %v327 = vpack.c.b16 %v314, %v313
    %v328 = vpack.c.b16 %v316, %v315
    %v329 = vpack.c.b16 %v318, %v317
    %v330 = vpack.c.b16 %v320, %v319
    %v331 = vpack.c.b16 %v322, %v321
    %v332 = vpack.c.b16 %v324, %v323
    %341 = vmatprep.subr.bf16.mxu0 0
    %342 = vmatpush1.bf16.msra.mxu0 %v332
    %343 = vmatprep.subr.bf16.mxu0 0
    %344 = vmatpush1.bf16.msra.mxu0 %v331
    %345 = vmatprep.subr.bf16.mxu0 0
    %346 = vmatpush1.bf16.msra.mxu0 %v330
    %347 = vmatprep.subr.bf16.mxu0 0
    %348 = vmatpush1.bf16.msra.mxu0 %v329
    %349 = vmatprep.subr.bf16.mxu0 0
    %350 = vmatpush1.bf16.msra.mxu0 %v328
    %351 = vmatprep.subr.bf16.mxu0 0
    %352 = vmatpush1.bf16.msra.mxu0 %v327
    %353 = vmatprep.subr.bf16.mxu0 0
    %354 = vmatpush1.bf16.msra.mxu0 %v326
    %355 = vmatprep.subr.bf16.mxu0 0
    %356 = vmatpush1.bf16.msra.mxu0 %v325
    %357 = vmatprep.subr.bf16.mxu0 0
    %358 = vmatpush2.bf16.msra.mxu0 0
    %359 = vmatprep.subr.bf16.mxu0 0
    %360 = vmatpush2.bf16.msra.mxu0 0
    %361 = vmatprep.subr.bf16.mxu0 0
    %362 = vmatpush2.bf16.msra.mxu0 0
    %363 = vmatprep.subr.bf16.mxu0 0
    %364 = vmatpush2.bf16.msra.mxu0 0
    %365 = vmatprep.subr.bf16.mxu0 0
    %366 = vmatpush2.bf16.msra.mxu0 0
    %367 = vmatprep.subr.bf16.mxu0 0
    %368 = vmatpush2.bf16.msra.mxu0 0
    %369 = vmatprep.subr.bf16.mxu0 0
    %370 = vmatpush2.bf16.msra.mxu0 0
    %371 = vmatprep.subr.bf16.mxu0 0
    %372 = vmatpush2.bf16.msra.mxu0 0
    %373 = vmatprep.mubr.bf16.mxu0 0
    %374 = vmatmul.mubr.bf16.gmra.mxu0 %v271
    %v375 = vpop.f32.mrf.mxu0
    %v376 = vadd.f32 %v292, %v375
    %v377 = vpop.f32.mrf.mxu0
    %v378 = vpop.f32.mrf.mxu0
    %v379 = vpop.f32.mrf.mxu0
    %380 = vdwg.mxu0
    %vm381 = vcmask 261120
    %382 = vst.msk [vmem:[#allocation5] sm:$0xff] %vm381, %v376
    // Predicated region
    $region30: #{tpu_custom_call.1} parent=1 // pred_check
      _
    $region31: #{tpu_custom_call.1} parent=1 // pred_check_branch
      %384 = sbr.rel (0) target = $region33
    $region32: #{tpu_custom_call.1} parent=1 // pred_region
      %s386 = ssub.s32 128, 128
      %387 = vsyncadd [#allocation4], %s386
      %s389 = sshll.u32 [#allocation5], 4
      %s390 = int_to_ptr.vmem [resolvable:$true] %s389
      %392 = dma.vmem_to_hbm [thread:$0]  %s390, 128, %s6, [#allocation4]
    $region33: #{tpu_custom_call.1} parent=1 // pred_fallthru
      _
    // Predicated region
    $region34: #{tpu_custom_call.1} parent=1 // pred_check
      _
    $region35: #{tpu_custom_call.1} parent=1 // pred_check_branch
      %394 = sbr.rel (0) target = $region37
    $region36: #{tpu_custom_call.1} parent=1 // pred_region
      %395 = dma.done [#allocation4], 128
    $region37: #{tpu_custom_call.1} parent=1 // pred_fallthru
      _
    %396 = vsyncpa [#allocation3], 1
    %397 = vsyncpa [#allocation4], 1

</llo_original>
